<compile_context>
chip_gen: v6e
topology: v6e:2x2x1
jax: 0.10.0
libtpu: 0.0.40
codegen_flags: <defaults>
</compile_context>

<pallas_src>
import functools

import jax
import jax.numpy as jnp
from jax import lax
from jax.experimental import pallas as pl
from jax.experimental.pallas import tpu as pltpu

C_IN = 3            # the module is fixed at Conv2d(3, 64, ...)
C_PAD = 8           # channels padded to one sublane group
C_HID = 64
K = 3
MAX_CHUNK_PIX = 8192   # keeps per-chunk patches/hidden transients ~< 4.5 MiB


def _decoder_kernel(x_ref, w1_ref, b1_ref, w2_ref, b2_ref, o_ref,
                    *, n_chunks, chunk_pix, w_pad):
    """One batch element per grid step.

    x_ref : (1, C_PAD, Lf)  zero-padded image, flat pixels on the lane dim
    w1_ref: (64, 72)        3x3 conv as a matmul over (tap, channel)
    b1_ref: (64, 1)
    w2_ref: (1, 64)         1x1 conv
    b2_ref: (1,)            scalar bias in SMEM
    o_ref : (1, n_chunks, chunk_pix)  flat (row-padded-width) output
    """
    b2 = b2_ref[0]
    for ci in range(n_chunks):                  # static unroll over row chunks
        base = ci * chunk_pix
        taps = []
        for ky in range(K):
            for kx in range(K):
                off = base + ky * w_pad + kx    # static offset
                taps.append(x_ref[0, :, off:off + chunk_pix])    # (C_PAD, P)
        patches = jnp.concatenate(taps, axis=0)                  # (72, P)
        h = jnp.dot(w1_ref[...], patches,
                    preferred_element_type=jnp.float32)          # (64, P)
        h = jnp.maximum(h + b1_ref[...], 0.0)
        out = jnp.dot(w2_ref[...], h,
                      preferred_element_type=jnp.float32)        # (1, P)
        out = jax.nn.sigmoid(out + b2)
        o_ref[0, ci:ci + 1, :] = out.astype(o_ref.dtype)


def _pick_row_chunk(h, w_pad):
    """Largest divisor of H whose chunk (rows * padded width) fits the budget."""
    best = 1
    for th in range(1, h + 1):
        if h % th == 0 and th * w_pad <= MAX_CHUNK_PIX:
            best = th
    return best


def decoder_forward(x_nchw, w1, b1, w2, b2):
    """x_nchw: (B, 3, H, W) float32. Returns (B, 1, H, W) float32."""
    B, C, H, W = x_nchw.shape
    assert C == C_IN
    w_pad = W + 2          # conv padding=1 on both sides
    h_pad = H + 3          # +1 top, +1 bottom, +1 safety row so flat taps of
                           # the last (junk) columns stay in bounds
    l_flat = h_pad * w_pad

    # ---- layout glue only: zero-pad channels/space and flatten the pixels ----
    xp = jnp.pad(x_nchw, ((0, 0), (0, C_PAD - C), (1, 2), (1, 1)))
    xf = xp.reshape(B, C_PAD, l_flat)

    # ---- weights as matmul operands (tap-major, channel-minor columns) ----
    w1p = jnp.pad(w1, ((0, 0), (0, C_PAD - C), (0, 0), (0, 0)))  # (64, 8, 3, 3)
    w1_mat = jnp.transpose(w1p, (0, 2, 3, 1)).reshape(C_HID, K * K * C_PAD)
    b1_col = b1.reshape(C_HID, 1)
    w2_mat = w2.reshape(1, C_HID)
    b2_s = b2.reshape(1).astype(jnp.float32)

    th = _pick_row_chunk(H, w_pad)
    n_chunks = H // th
    chunk_pix = th * w_pad   # pixels per chunk (incl. 2 junk columns per row)

    kernel = functools.partial(_decoder_kernel, n_chunks=n_chunks,
                               chunk_pix=chunk_pix, w_pad=w_pad)

    out_flat = pl.pallas_call(
        kernel,
        out_shape=jax.ShapeDtypeStruct((B, n_chunks, chunk_pix), jnp.float32),
        grid=(B,),
        in_specs=[
            pl.BlockSpec((1, C_PAD, l_flat), lambda b: (b, 0, 0)),
            pl.BlockSpec((C_HID, K * K * C_PAD), lambda b: (0, 0)),
            pl.BlockSpec((C_HID, 1), lambda b: (0, 0)),
            pl.BlockSpec((1, C_HID), lambda b: (0, 0)),
            pl.BlockSpec(memory_space=pltpu.SMEM),
        ],
        out_specs=pl.BlockSpec((1, n_chunks, chunk_pix), lambda b: (b, 0, 0)),
        compiler_params=pltpu.CompilerParams(
            dimension_semantics=("parallel",)),
    )(xf, w1_mat, b1_col, w2_mat, b2_s)

    # (B, n_chunks, chunk_pix) -> (B, H, W+2) -> drop junk columns -> NCHW
    out = out_flat.reshape(B, H, w_pad)[:, :, :W]
    return out[:, None, :, :]


def decoder_reference(x_nchw, w1, b1, w2, b2):
    """Pure-JAX reference matching the PyTorch forward exactly (NCHW)."""
    dn = lax.conv_dimension_numbers(x_nchw.shape, w1.shape,
                                    ("NCHW", "OIHW", "NCHW"))
    h = lax.conv_general_dilated(x_nchw, w1, window_strides=(1, 1),
                                 padding=((1, 1), (1, 1)),
                                 dimension_numbers=dn)
    h = h + b1.reshape(1, -1, 1, 1)
    h = jnp.maximum(h, 0.0)
    dn2 = lax.conv_dimension_numbers(h.shape, w2.shape,
                                     ("NCHW", "OIHW", "NCHW"))
    o = lax.conv_general_dilated(h, w2, window_strides=(1, 1),
                                 padding=((0, 0), (0, 0)),
                                 dimension_numbers=dn2)
    o = o + b2.reshape(1, -1, 1, 1)
    return jax.nn.sigmoid(o)


if __name__ == "__main__":
    key = jax.random.PRNGKey(0)
    k_x, k_w1, k_b1, k_w2, k_b2 = jax.random.split(key, 5)

    B, C, H, W = 2, 3, 16, 16
    x = jax.random.normal(k_x, (B, C, H, W), dtype=jnp.float32)

    # Deterministic synthetic parameters (shapes from the module's __init__).
    w1 = jax.random.normal(k_w1, (64, 3, 3, 3), dtype=jnp.float32) * 0.1
    b1 = jax.random.normal(k_b1, (64,), dtype=jnp.float32) * 0.05
    w2 = jax.random.normal(k_w2, (1, 64, 1, 1), dtype=jnp.float32) * 0.1
    b2 = jax.random.normal(k_b2, (1,), dtype=jnp.float32) * 0.05

    out = jax.block_until_ready(decoder_forward(x, w1, b1, w2, b2))
    ref = jax.block_until_ready(decoder_reference(x, w1, b1, w2, b2))

    assert out.shape == (B, 1, H, W), out.shape
    assert jnp.allclose(out, ref, rtol=1e-5, atol=1e-5), \
        float(jnp.max(jnp.abs(out - ref)))

    print("KERNEL_OK")
</pallas_src>

<mosaic_0001>
module attributes {stable_mosaic.version = 11 : i64} {
  func.func @_decoder_kernel(%arg0: i32, %arg1: memref<1x8x342xf32, #tpu.memory_space<vmem>>, %arg2: memref<64x72xf32, #tpu.memory_space<vmem>>, %arg3: memref<64x1xf32, #tpu.memory_space<vmem>>, %arg4: memref<1x64xf32, #tpu.memory_space<vmem>>, %arg5: memref<1xf32, #tpu.memory_space<smem>>, %arg6: memref<1x1x288xf32, #tpu.memory_space<vmem>>) attributes {dimension_semantics = [#tpu.dimension_semantics<parallel>], iteration_bounds = array<i64: 2>, scalar_prefetch = 0 : i64, scratch_operands = 0 : i64, tpu.core_type = #tpu.core_type<tc>, window_params = [{transform_indices = @transform_0, window_bounds = array<i64: 1, 8, 342>}, {pipeline_mode = #tpu.pipeline_mode<synchronous>, transform_indices = @transform_1, window_bounds = array<i64: 64, 72>}, {pipeline_mode = #tpu.pipeline_mode<synchronous>, transform_indices = @transform_2, window_bounds = array<i64: 64, 1>}, {pipeline_mode = #tpu.pipeline_mode<synchronous>, transform_indices = @transform_3, window_bounds = array<i64: 1, 64>}, {transform_indices = @transform_4, window_bounds = array<i64: 1>}, {transform_indices = @transform_5, window_bounds = array<i64: 1, 1, 288>}]} {
    %c0 = arith.constant 0 : index
    %0 = memref.load %arg5[%c0] : memref<1xf32, #tpu.memory_space<smem>>
    %c0_0 = arith.constant 0 : index
    %c0_1 = arith.constant 0 : index
    %c0_2 = arith.constant 0 : index
    %1 = vector.load %arg1[%c0_0, %c0_1, %c0_2] : memref<1x8x342xf32, #tpu.memory_space<vmem>>, vector<1x8x288xf32>
    %2 = vector.shape_cast %1 : vector<1x8x288xf32> to vector<8x288xf32>
    %c0_3 = arith.constant 0 : index
    %c0_4 = arith.constant 0 : index
    %c1 = arith.constant 1 : index
    %3 = vector.load %arg1[%c0_3, %c0_4, %c1] : memref<1x8x342xf32, #tpu.memory_space<vmem>>, vector<1x8x288xf32>
    %4 = vector.shape_cast %3 : vector<1x8x288xf32> to vector<8x288xf32>
    %c0_5 = arith.constant 0 : index
    %c0_6 = arith.constant 0 : index
    %c2 = arith.constant 2 : index
    %5 = vector.load %arg1[%c0_5, %c0_6, %c2] : memref<1x8x342xf32, #tpu.memory_space<vmem>>, vector<1x8x288xf32>
    %6 = vector.shape_cast %5 : vector<1x8x288xf32> to vector<8x288xf32>
    %c0_7 = arith.constant 0 : index
    %c0_8 = arith.constant 0 : index
    %c18 = arith.constant 18 : index
    %7 = vector.load %arg1[%c0_7, %c0_8, %c18] : memref<1x8x342xf32, #tpu.memory_space<vmem>>, vector<1x8x288xf32>
    %8 = vector.shape_cast %7 : vector<1x8x288xf32> to vector<8x288xf32>
    %c0_9 = arith.constant 0 : index
    %c0_10 = arith.constant 0 : index
    %c19 = arith.constant 19 : index
    %9 = vector.load %arg1[%c0_9, %c0_10, %c19] : memref<1x8x342xf32, #tpu.memory_space<vmem>>, vector<1x8x288xf32>
    %10 = vector.shape_cast %9 : vector<1x8x288xf32> to vector<8x288xf32>
    %c0_11 = arith.constant 0 : index
    %c0_12 = arith.constant 0 : index
    %c20 = arith.constant 20 : index
    %11 = vector.load %arg1[%c0_11, %c0_12, %c20] : memref<1x8x342xf32, #tpu.memory_space<vmem>>, vector<1x8x288xf32>
    %12 = vector.shape_cast %11 : vector<1x8x288xf32> to vector<8x288xf32>
    %c0_13 = arith.constant 0 : index
    %c0_14 = arith.constant 0 : index
    %c36 = arith.constant 36 : index
    %13 = vector.load %arg1[%c0_13, %c0_14, %c36] : memref<1x8x342xf32, #tpu.memory_space<vmem>>, vector<1x8x288xf32>
    %14 = vector.shape_cast %13 : vector<1x8x288xf32> to vector<8x288xf32>
    %c0_15 = arith.constant 0 : index
    %c0_16 = arith.constant 0 : index
    %c37 = arith.constant 37 : index
    %15 = vector.load %arg1[%c0_15, %c0_16, %c37] : memref<1x8x342xf32, #tpu.memory_space<vmem>>, vector<1x8x288xf32>
    %16 = vector.shape_cast %15 : vector<1x8x288xf32> to vector<8x288xf32>
    %c0_17 = arith.constant 0 : index
    %c0_18 = arith.constant 0 : index
    %c38 = arith.constant 38 : index
    %17 = vector.load %arg1[%c0_17, %c0_18, %c38] : memref<1x8x342xf32, #tpu.memory_space<vmem>>, vector<1x8x288xf32>
    %18 = vector.shape_cast %17 : vector<1x8x288xf32> to vector<8x288xf32>
    %19 = tpu.concatenate %2, %4, %6, %8, %10, %12, %14, %16, %18 in 0 : vector<8x288xf32>, vector<8x288xf32>, vector<8x288xf32>, vector<8x288xf32>, vector<8x288xf32>, vector<8x288xf32>, vector<8x288xf32>, vector<8x288xf32>, vector<8x288xf32> -> vector<72x288xf32>
    %c0_19 = arith.constant 0 : index
    %c0_20 = arith.constant 0 : index
    %20 = vector.load %arg2[%c0_19, %c0_20] : memref<64x72xf32, #tpu.memory_space<vmem>>, vector<64x72xf32>
    %cst = arith.constant dense<0.000000e+00> : vector<64x288xf32>
    %21 = tpu.matmul %20, %19, %cst {dimension_numbers = #tpu.dot_dimension_numbers<[1], [0], [0], [1], [0, 0, 1, 1], [], []>} : vector<64x72xf32>, vector<72x288xf32>, vector<64x288xf32> -> vector<64x288xf32>
    %c0_21 = arith.constant 0 : index
    %c0_22 = arith.constant 0 : index
    %22 = vector.load %arg3[%c0_21, %c0_22] : memref<64x1xf32, #tpu.memory_space<vmem>>, vector<64x1xf32>
    %23 = vector.broadcast %22 : vector<64x1xf32> to vector<64x288xf32>
    %24 = arith.addf %21, %23 : vector<64x288xf32>
    %cst_23 = arith.constant 0.000000e+00 : f32
    %25 = vector.broadcast %cst_23 : f32 to vector<64x288xf32>
    %26 = arith.maximumf %24, %25 : vector<64x288xf32>
    %c0_24 = arith.constant 0 : index
    %c0_25 = arith.constant 0 : index
    %27 = vector.load %arg4[%c0_24, %c0_25] : memref<1x64xf32, #tpu.memory_space<vmem>>, vector<1x64xf32>
    %cst_26 = arith.constant dense<0.000000e+00> : vector<1x288xf32>
    %28 = tpu.matmul %27, %26, %cst_26 {dimension_numbers = #tpu.dot_dimension_numbers<[1], [0], [0], [1], [0, 0, 1, 1], [], []>} : vector<1x64xf32>, vector<64x288xf32>, vector<1x288xf32> -> vector<1x288xf32>
    %29 = vector.broadcast %0 : f32 to vector<1x288xf32>
    %30 = arith.addf %28, %29 : vector<1x288xf32>
    %31 = arith.negf %30 : vector<1x288xf32>
    %32 = math.exp %31 : vector<1x288xf32>
    %cst_27 = arith.constant 1.000000e+00 : f32
    %33 = vector.broadcast %cst_27 : f32 to vector<1x288xf32>
    %34 = arith.addf %33, %32 : vector<1x288xf32>
    %35 = arith.divf %33, %34 : vector<1x288xf32>
    %c0_28 = arith.constant 0 : index
    %c0_29 = arith.constant 0 : index
    %c0_30 = arith.constant 0 : index
    %36 = vector.load %arg6[%c0_28, %c0_29, %c0_30] : memref<1x1x288xf32, #tpu.memory_space<vmem>>, vector<1x1x288xf32>
    %37 = vector.shape_cast %36 : vector<1x1x288xf32> to vector<1x288xf32>
    %38 = vector.shape_cast %35 : vector<1x288xf32> to vector<1x1x288xf32>
    tpu.vector_store %arg6[%c0_28, %c0_29, %c0_30], %38 {strides = array<i32>} : memref<1x1x288xf32, #tpu.memory_space<vmem>>, vector<1x1x288xf32>,
    return
  }
  func.func @transform_0(%arg0: i32) -> (i32, i32, i32) {
    %c0_i32 = arith.constant 0 : i32
    %c0_i32_0 = arith.constant 0 : i32
    %c0_i32_1 = arith.constant 0 : i32
    return %arg0, %c0_i32, %c0_i32_0 : i32, i32, i32
  }
  func.func @transform_1(%arg0: i32) -> (i32, i32) {
    %c0_i32 = arith.constant 0 : i32
    %c0_i32_0 = arith.constant 0 : i32
    %c0_i32_1 = arith.constant 0 : i32
    return %c0_i32, %c0_i32_0 : i32, i32
  }
  func.func @transform_2(%arg0: i32) -> (i32, i32) {
    %c0_i32 = arith.constant 0 : i32
    %c0_i32_0 = arith.constant 0 : i32
    %c0_i32_1 = arith.constant 0 : i32
    return %c0_i32, %c0_i32_0 : i32, i32
  }
  func.func @transform_3(%arg0: i32) -> (i32, i32) {
    %c0_i32 = arith.constant 0 : i32
    %c0_i32_0 = arith.constant 0 : i32
    %c0_i32_1 = arith.constant 0 : i32
    return %c0_i32, %c0_i32_0 : i32, i32
  }
  func.func @transform_4(%arg0: i32) -> i32 {
    %c0_i32 = arith.constant 0 : i32
    %c0_i32_0 = arith.constant 0 : i32
    return %c0_i32 : i32
  }
  func.func @transform_5(%arg0: i32) -> (i32, i32, i32) {
    %c0_i32 = arith.constant 0 : i32
    %c0_i32_0 = arith.constant 0 : i32
    %c0_i32_1 = arith.constant 0 : i32
    return %arg0, %c0_i32, %c0_i32_0 : i32, i32, i32
  }
}

</mosaic_0001>

<llo_original>
// kernel: tpu_custom_call.1
$region0: #{tpu_custom_call.1}
  #allocation0 [shape = 'u32[]', space=smem, size = 0x4, offset = 0x4, fixed_abs, tag = 'smem constant byte address 0x4 - core index']
  #allocation1 [shape = 'u32[144,128]{1,0:T(1,128)}', space=vmem, size = 0x12000, scoped, tag = 'internal scratch']
  #allocation2 [shape = 'f32[1]{0:T(128)S(6)}', space=smem, size = 0x200, scoped, tag = 'scoped memory for tpu_custom_call.1']
  %s0 = inlined_call_operand.hbm [shape: f32[2,8,342], index: 0, kind: input, shape index: {}]
  %s1 = inlined_call_operand.vmem [shape: f32[64,72], index: 1, kind: input, shape index: {}]
  %s2 = inlined_call_operand.vmem [shape: f32[64,1], index: 2, kind: input, shape index: {}]
  %s3 = inlined_call_operand.vmem [shape: f32[1,64], index: 3, kind: input, shape index: {}]
  %s4 = inlined_call_operand.<no memory space> [shape: f32[1], index: 4, kind: input, shape index: {}]
  %s5 = inlined_call_operand.hbm [shape: f32[2,1,288], index: 5, kind: output, shape index: {}]
  %s6 = sld [smem:[#allocation0]]
  $region57: #{tpu_custom_call.1} parent=0
    _
  %s8 = ssub.s32 1, %s6
  %s9 = scalar_select 0, %s8, %s6
  %10 = sst [smem:[#allocation2]] %s4
  $region1: #{tpu_custom_call.1} parent=0
    #allocation3 [shape = 'u8[24576]{0}', space=vmem, size = 0x6000, scoped, tag = 'input window, operand 0']
    #allocation4 [shape = 's32[2]{0}', space=sflag, size = 0x8, scoped, tag = 'scoped memory for tpu_custom_call.1']
    #allocation5 [shape = 's32[2]{0}', space=sflag, size = 0x8, scoped, tag = 'scoped memory for tpu_custom_call.1']
    #allocation6 [shape = 'u8[3072]{0}', space=vmem, size = 0xc00, scoped, tag = 'output window, operand 0']
    %11 = vsyncpa [#allocation4], 0
    %s12 = scalar_lea.sflag [#allocation4], 1
    %13 = vsyncpa %s12, 0
    %14 = vsyncpa [#allocation5], 0
    %s15 = scalar_lea.sflag [#allocation5], 1
    %16 = vsyncpa %s15, 0
    loop: start=0, step=1, limit=4
    $region2: #{tpu_custom_call.1} parent=1 // loop_pre_header
      _
    $region3: #{tpu_custom_call.1} parent=1 // loop_header
      %s18 = sphi 0, %s22
      %p19 = scmp.ge.s32.totalorder %s18, 4
      %s28 = sphi 0, %s30
      %s31 = sphi 0, %s28
      %s32 = sphi 0, %s31
      %s48 = sphi 0, %s32
      %s52 = sphi 0, %s52
      %s54 = sphi 0, %s52
      %s55 = sphi 0, %s54
      %s69 = sphi 0, %s55
      %s73 = sphi 0, %s73
      %s75 = sphi 0, %s73
      %s76 = sphi 0, %s75
      %s90 = sphi 0, %s76
      %s94 = sphi 0, %s94
      %s96 = sphi 0, %s94
      %s97 = sphi 0, %s96
      %s111 = sphi 0, %s97
      %s115 = sphi 0, %s115
      %s117 = sphi 0, %s115
      %s118 = sphi 0, %s117
      %s132 = sphi 0, %s118
      %s138 = sphi 0, %s140
      %s141 = sphi 0, %s138
      %s142 = sphi 0, %s141
      %s158 = sphi 0, %s142
    $region4: #{tpu_custom_call.1} parent=1 // loop_header_branch
      %21 = sbr.rel (%p19) target = $region8
    $region5: #{tpu_custom_call.1} parent=1 // loop_body
      %s23 = ssub.s32 %s18, 1
      %s24 = ssub.s32 %s18, 2
      %s25 = sadd.s32 %s18, 1
      %s26 = ssub.s32 %s18, %s25
      %p27 = scmp.eq.s32.totalorder %s26, 0
      %s29 = sadd.s32 %s28, 1
      %s30 = scalar_select %p27, %s28, %s29
      %p33 = pneg %p27
      %p34 = scmp.eq.s32.totalorder %s18, 1
      %p35 = por %p33, %p34
      %p36 = scmp.ne.s32.totalorder %s28, %s31
      %p37 = scmp.eq.s32.totalorder %s18, 0
      %p38 = por %p36, %p37
      %p39 = scmp.ne.s32.totalorder %s28, %s31
      %p40 = scmp.eq.s32.totalorder %s23, 1
      %p41 = por %p39, %p40
      %p42 = scmp.ne.s32.totalorder %s31, %s32
      %p43 = scmp.eq.s32.totalorder %s23, 0
      %p44 = por %p42, %p43
      %p45 = scmp.ne.s32.totalorder %s31, %s32
      %p46 = scmp.eq.s32.totalorder %s24, 1
      %p47 = por %p45, %p46
      %p49 = scmp.ne.s32.totalorder %s32, %s48
      %p50 = scmp.eq.s32.totalorder %s24, 0
      %p51 = por %p49, %p50
      %s53 = sadd.s32 %s52, 1
      %p56 = scmp.eq.s32.totalorder %s18, 1
      %p57 = scmp.ne.s32.totalorder %s52, %s54
      %p58 = scmp.eq.s32.totalorder %s18, 0
      %p59 = por %p57, %p58
      %p60 = scmp.ne.s32.totalorder %s52, %s54
      %p61 = scmp.eq.s32.totalorder %s23, 1
      %p62 = por %p60, %p61
      %p63 = scmp.ne.s32.totalorder %s54, %s55
      %p64 = scmp.eq.s32.totalorder %s23, 0
      %p65 = por %p63, %p64
      %p66 = scmp.ne.s32.totalorder %s54, %s55
      %p67 = scmp.eq.s32.totalorder %s24, 1
      %p68 = por %p66, %p67
      %p70 = scmp.ne.s32.totalorder %s55, %s69
      %p71 = scmp.eq.s32.totalorder %s24, 0
      %p72 = por %p70, %p71
      %s74 = sadd.s32 %s73, 1
      %p77 = scmp.eq.s32.totalorder %s18, 1
      %p78 = scmp.ne.s32.totalorder %s73, %s75
      %p79 = scmp.eq.s32.totalorder %s18, 0
      %p80 = por %p78, %p79
      %p81 = scmp.ne.s32.totalorder %s73, %s75
      %p82 = scmp.eq.s32.totalorder %s23, 1
      %p83 = por %p81, %p82
      %p84 = scmp.ne.s32.totalorder %s75, %s76
      %p85 = scmp.eq.s32.totalorder %s23, 0
      %p86 = por %p84, %p85
      %p87 = scmp.ne.s32.totalorder %s75, %s76
      %p88 = scmp.eq.s32.totalorder %s24, 1
      %p89 = por %p87, %p88
      %p91 = scmp.ne.s32.totalorder %s76, %s90
      %p92 = scmp.eq.s32.totalorder %s24, 0
      %p93 = por %p91, %p92
      %s95 = sadd.s32 %s94, 1
      %p98 = scmp.eq.s32.totalorder %s18, 1
      %p99 = scmp.ne.s32.totalorder %s94, %s96
      %p100 = scmp.eq.s32.totalorder %s18, 0
      %p101 = por %p99, %p100
      %p102 = scmp.ne.s32.totalorder %s94, %s96
      %p103 = scmp.eq.s32.totalorder %s23, 1
      %p104 = por %p102, %p103
      %p105 = scmp.ne.s32.totalorder %s96, %s97
      %p106 = scmp.eq.s32.totalorder %s23, 0
      %p107 = por %p105, %p106
      %p108 = scmp.ne.s32.totalorder %s96, %s97
      %p109 = scmp.eq.s32.totalorder %s24, 1
      %p110 = por %p108, %p109
      %p112 = scmp.ne.s32.totalorder %s97, %s111
      %p113 = scmp.eq.s32.totalorder %s24, 0
      %p114 = por %p112, %p113
      %s116 = sadd.s32 %s115, 1
      %p119 = scmp.eq.s32.totalorder %s18, 1
      %p120 = scmp.ne.s32.totalorder %s115, %s117
      %p121 = scmp.eq.s32.totalorder %s18, 0
      %p122 = por %p120, %p121
      %p123 = scmp.ne.s32.totalorder %s115, %s117
      %p124 = scmp.eq.s32.totalorder %s23, 1
      %p125 = por %p123, %p124
      %p126 = scmp.ne.s32.totalorder %s117, %s118
      %p127 = scmp.eq.s32.totalorder %s23, 0
      %p128 = por %p126, %p127
      %p129 = scmp.ne.s32.totalorder %s117, %s118
      %p130 = scmp.eq.s32.totalorder %s24, 1
      %p131 = por %p129, %p130
      %p133 = scmp.ne.s32.totalorder %s118, %s132
      %p134 = scmp.eq.s32.totalorder %s24, 0
      %p135 = por %p133, %p134
      %s136 = ssub.s32 %s18, %s25
      %p137 = scmp.eq.s32.totalorder %s136, 0
      %s139 = sadd.s32 %s138, 1
      %s140 = scalar_select %p137, %s138, %s139
      %p143 = pneg %p137
      %p144 = scmp.eq.s32.totalorder %s18, 1
      %p145 = por %p143, %p144
      %p146 = scmp.ne.s32.totalorder %s138, %s141
      %p147 = scmp.eq.s32.totalorder %s18, 0
      %p148 = por %p146, %p147
      %p149 = scmp.ne.s32.totalorder %s138, %s141
      %p150 = scmp.eq.s32.totalorder %s23, 1
      %p151 = por %p149, %p150
      %p152 = scmp.ne.s32.totalorder %s141, %s142
      %p153 = scmp.eq.s32.totalorder %s23, 0
      %p154 = por %p152, %p153
      %p155 = scmp.ne.s32.totalorder %s141, %s142
      %p156 = scmp.eq.s32.totalorder %s24, 1
      %p157 = por %p155, %p156
      %p159 = scmp.ne.s32.totalorder %s142, %s158
      %p160 = scmp.eq.s32.totalorder %s24, 0
      %p161 = por %p159, %p160
      %p162 = scmp.le.s32.totalorder 1, %s18
      %p163 = scmp.lt.s32.totalorder %s18, 3
      %p164 = pnand %p162, %p163
      %p165 = pneg %p164
      // Predicated region
      $region9: #{tpu_custom_call.1} parent=5 // pred_check
        _
      $region10: #{tpu_custom_call.1} parent=5 // pred_check_branch
        %167 = sbr.rel (%p164) target = $region12
      $region11: #{tpu_custom_call.1} parent=5 // pred_region
        %s168 = ssub.s32 %s18, 1
        // Predicated region
        $region13: #{tpu_custom_call.1} parent=11 // pred_check
          %p169 = pneg %p65
        $region14: #{tpu_custom_call.1} parent=11 // pred_check_branch
          %171 = sbr.rel (%p169) target = $region16
        $region15: #{tpu_custom_call.1} parent=11 // pred_region
          _
        $region16: #{tpu_custom_call.1} parent=11 // pred_fallthru
          _
        // Predicated region
        $region17: #{tpu_custom_call.1} parent=11 // pred_check
          %p172 = pneg %p86
        $region18: #{tpu_custom_call.1} parent=11 // pred_check_branch
          %174 = sbr.rel (%p172) target = $region20
        $region19: #{tpu_custom_call.1} parent=11 // pred_region
          _
        $region20: #{tpu_custom_call.1} parent=11 // pred_fallthru
          _
        // Predicated region
        $region21: #{tpu_custom_call.1} parent=11 // pred_check
          %p175 = pneg %p107
        $region22: #{tpu_custom_call.1} parent=11 // pred_check_branch
          %177 = sbr.rel (%p175) target = $region24
        $region23: #{tpu_custom_call.1} parent=11 // pred_region
          _
        $region24: #{tpu_custom_call.1} parent=11 // pred_fallthru
          _
        // Predicated region
        $region25: #{tpu_custom_call.1} parent=11 // pred_check
          %p178 = pneg %p128
        $region26: #{tpu_custom_call.1} parent=11 // pred_check_branch
          %180 = sbr.rel (%p178) target = $region28
        $region27: #{tpu_custom_call.1} parent=11 // pred_region
          _
        $region28: #{tpu_custom_call.1} parent=11 // pred_fallthru
          _
      $region12: #{tpu_custom_call.1} parent=5 // pred_fallthru
        _
      %p181 = scmp.lt.s32.totalorder %s18, 2
      // Predicated region
      $region29: #{tpu_custom_call.1} parent=5 // pred_check
        %p182 = pneg %p181
      $region30: #{tpu_custom_call.1} parent=5 // pred_check_branch
        %184 = sbr.rel (%p182) target = $region32
      $region31: #{tpu_custom_call.1} parent=5 // pred_region
        // Predicated region
        $region33: #{tpu_custom_call.1} parent=31 // pred_check
          %p185 = pneg %p38
        $region34: #{tpu_custom_call.1} parent=31 // pred_check_branch
          %187 = sbr.rel (%p185) target = $region36
        $region35: #{tpu_custom_call.1} parent=31 // pred_region
          %s188 = sand.u32 %s28, 1
          %s189 = scalar_lea.sflag [#allocation4], %s188
          %s190 = sand.u32 %s28, 1
          %s191 = smul.addr %s190, 24
          %s192 = scalar_lea.vmem [#allocation3], %s191
          %s194 = ssub.s32 384, 384
          %195 = vsyncadd %s189, %s194
          %s196 = smul.addr %s18, 3
          %s197 = smul.addr %s196, 128
          %s198 = scalar_lea.hbm %s0, %s197
          %s200 = sshll.u32 %s192, 4
          %s201 = int_to_ptr.vmem [resolvable:$true] %s200
          %203 = dma.hbm_to_vmem [thread:$0]  %s198, 384, %s201, %s189
        $region36: #{tpu_custom_call.1} parent=31 // pred_fallthru
          _
      $region32: #{tpu_custom_call.1} parent=5 // pred_fallthru
        _
      %p204 = scmp.le.s32.totalorder 1, %s18
      %p205 = scmp.lt.s32.totalorder %s18, 3
      %p206 = pnand %p204, %p205
      %p207 = pneg %p206
      // Predicated region
      $region37: #{tpu_custom_call.1} parent=5 // pred_check
        _
      $region38: #{tpu_custom_call.1} parent=5 // pred_check_branch
        %209 = sbr.rel (%p206) target = $region40
      $region39: #{tpu_custom_call.1} parent=5 // pred_region
        %s210 = ssub.s32 %s18, 1
        %s211 = sand.u32 %s31, 1
        %s212 = scalar_lea.sflag [#allocation4], %s211
        %s213 = sand.u32 %s31, 1
        %s214 = smul.addr %s213, 24
        %s215 = scalar_lea.vmem [#allocation3], %s214
        // Predicated region
        $region41: #{tpu_custom_call.1} parent=39 // pred_check
          %p216 = pneg %p44
        $region42: #{tpu_custom_call.1} parent=39 // pred_check_branch
          %218 = sbr.rel (%p216) target = $region44
        $region43: #{tpu_custom_call.1} parent=39 // pred_region
          %219 = dma.done %s212, 384
        $region44: #{tpu_custom_call.1} parent=39 // pred_fallthru
          _
        %s220 = sand.u32 %s31, 1
        %s221 = scalar_lea.sflag [#allocation4], %s220
        %s222 = sand.u32 %s31, 1
        %s223 = smul.addr %s222, 24
        %s224 = scalar_lea.vmem [#allocation3], %s223
        %p225 = pneg %p44
        %p226 = pneg %p41
        %p227 = pneg %p65
        %p228 = pneg %p62
        %p229 = pneg %p86
        %p230 = pneg %p83
        %p231 = pneg %p107
        %p232 = pneg %p104
        %p233 = pneg %p128
        %p234 = pneg %p125
        %p235 = pneg %p154
        %p236 = pneg %p151
        %s237 = sand.u32 %s141, 1
        %s238 = scalar_lea.sflag [#allocation5], %s237
        %s239 = sand.u32 %s141, 1
        %s240 = smul.addr %s239, 3
        %s241 = scalar_lea.vmem [#allocation6], %s240
        %s242 = sld [smem:[#allocation2]]
        %v243 = vld [vmem:[%s215] sm:$0xff]
        %v244 = vld [vmem:[%s215 + $0x8] sm:$0xff]
        %v245 = vld [vmem:[%s215 + $0x10] sm:$0xff]
        %249 = vrot.lane.b32.xlu0 %v243, 127
        %v250 = vpop.permute.xlu0 %249
        %251 = vrot.lane.b32.xlu0 %v244, 127
        %v252 = vpop.permute.xlu0 %251
        %253 = vrot.lane.b32.xlu0 %v245, 127
        %v254 = vpop.permute.xlu0 %253
        %vm255 = vcmask 1039360
        %v256 = vsel %vm255, %v250, %v252
        %v257 = vsel %vm255, %v252, %v254
        %261 = vrot.lane.b32.xlu0 %v243, 126
        %v262 = vpop.permute.xlu0 %261
        %263 = vrot.lane.b32.xlu0 %v244, 126
        %v264 = vpop.permute.xlu0 %263
        %265 = vrot.lane.b32.xlu0 %v245, 126
        %v266 = vpop.permute.xlu0 %265
        %vm267 = vcmask 1031168
        %v268 = vsel %vm267, %v262, %v264
        %v269 = vsel %vm267, %v264, %v266
        %273 = vrot.lane.b32.xlu0 %v243, 110
        %v274 = vpop.permute.xlu0 %273
        %275 = vrot.lane.b32.xlu0 %v244, 110
        %v276 = vpop.permute.xlu0 %275
        %277 = vrot.lane.b32.xlu0 %v245, 110
        %v278 = vpop.permute.xlu0 %277
        %vm279 = vcmask 900096
        %v280 = vsel %vm279, %v274, %v276
        %v281 = vsel %vm279, %v276, %v278
        %285 = vrot.lane.b32.xlu0 %v243, 109
        %v286 = vpop.permute.xlu0 %285
        %287 = vrot.lane.b32.xlu0 %v244, 109
        %v288 = vpop.permute.xlu0 %287
        %289 = vrot.lane.b32.xlu0 %v245, 109
        %v290 = vpop.permute.xlu0 %289
        %vm291 = vcmask 891904
        %v292 = vsel %vm291, %v286, %v288
        %v293 = vsel %vm291, %v288, %v290
        %297 = vrot.lane.b32.xlu0 %v243, 108
        %v298 = vpop.permute.xlu0 %297
        %299 = vrot.lane.b32.xlu0 %v244, 108
        %v300 = vpop.permute.xlu0 %299
        %301 = vrot.lane.b32.xlu0 %v245, 108
        %v302 = vpop.permute.xlu0 %301
        %vm303 = vcmask 883712
        %v304 = vsel %vm303, %v298, %v300
        %v305 = vsel %vm303, %v300, %v302
        %309 = vrot.lane.b32.xlu0 %v243, 92
        %v310 = vpop.permute.xlu0 %309
        %311 = vrot.lane.b32.xlu0 %v244, 92
        %v312 = vpop.permute.xlu0 %311
        %313 = vrot.lane.b32.xlu0 %v245, 92
        %v314 = vpop.permute.xlu0 %313
        %vm315 = vcmask 752640
        %v316 = vsel %vm315, %v310, %v312
        %v317 = vsel %vm315, %v312, %v314
        %321 = vrot.lane.b32.xlu0 %v243, 91
        %v322 = vpop.permute.xlu0 %321
        %323 = vrot.lane.b32.xlu0 %v244, 91
        %v324 = vpop.permute.xlu0 %323
        %325 = vrot.lane.b32.xlu0 %v245, 91
        %v326 = vpop.permute.xlu0 %325
        %vm327 = vcmask 744448
        %v328 = vsel %vm327, %v322, %v324
        %v329 = vsel %vm327, %v324, %v326
        %333 = vrot.lane.b32.xlu0 %v243, 90
        %v334 = vpop.permute.xlu0 %333
        %335 = vrot.lane.b32.xlu0 %v244, 90
        %v336 = vpop.permute.xlu0 %335
        %337 = vrot.lane.b32.xlu0 %v245, 90
        %v338 = vpop.permute.xlu0 %337
        %vm339 = vcmask 736256
        %v340 = vsel %vm339, %v334, %v336
        %v341 = vsel %vm339, %v336, %v338
        %v345 = vld [vmem:[%s1] sm:$0xff]
        %v346 = vld [vmem:[%s1 + $0x8] sm:$0xff]
        %v347 = vld [vmem:[%s1 + $0x10] sm:$0xff]
        %v348 = vld [vmem:[%s1 + $0x18] sm:$0xff]
        %v349 = vld [vmem:[%s1 + $0x20] sm:$0xff]
        %v350 = vld [vmem:[%s1 + $0x28] sm:$0xff]
        %v351 = vld [vmem:[%s1 + $0x30] sm:$0xff]
        %v352 = vld [vmem:[%s1 + $0x38] sm:$0xff]
        %v353 = vld [vmem:[%s2] sm:$0xff]
        %v354 = vld [vmem:[%s2 + $0x8] sm:$0xff]
        %v355 = vld [vmem:[%s2 + $0x10] sm:$0xff]
        %v356 = vld [vmem:[%s2 + $0x18] sm:$0xff]
        %v357 = vld [vmem:[%s2 + $0x20] sm:$0xff]
        %v358 = vld [vmem:[%s2 + $0x28] sm:$0xff]
        %v359 = vld [vmem:[%s2 + $0x30] sm:$0xff]
        %v360 = vld [vmem:[%s2 + $0x38] sm:$0xff]
        %362 = vset.pattern.permute.xlu0 0
        %363 = vperm.xlu0 %362, %v353
        %v364 = vpop.permute.xlu0 %363
        %367 = vset.pattern.permute.xlu0 0
        %368 = vperm.xlu0 %367, %v354
        %v369 = vpop.permute.xlu0 %368
        %372 = vset.pattern.permute.xlu0 0
        %373 = vperm.xlu0 %372, %v355
        %v374 = vpop.permute.xlu0 %373
        %377 = vset.pattern.permute.xlu0 0
        %378 = vperm.xlu0 %377, %v356
        %v379 = vpop.permute.xlu0 %378
        %382 = vset.pattern.permute.xlu0 0
        %383 = vperm.xlu0 %382, %v357
        %v384 = vpop.permute.xlu0 %383
        %387 = vset.pattern.permute.xlu0 0
        %388 = vperm.xlu0 %387, %v358
        %v389 = vpop.permute.xlu0 %388
        %392 = vset.pattern.permute.xlu0 0
        %393 = vperm.xlu0 %392, %v359
        %v394 = vpop.permute.xlu0 %393
        %397 = vset.pattern.permute.xlu0 0
        %398 = vperm.xlu0 %397, %v360
        %v399 = vpop.permute.xlu0 %398
        %vm401 = vcmask 588800
        %v403 = vsel %vm401, %v345, 0
        %v406 = vsel %vm401, %v346, 0
        %v409 = vsel %vm401, %v347, 0
        %v412 = vsel %vm401, %v348, 0
        %v415 = vsel %vm401, %v349, 0
        %v418 = vsel %vm401, %v350, 0
        %v421 = vsel %vm401, %v351, 0
        %v424 = vsel %vm401, %v352, 0
        %426 = vmatprep.subr.mxu0 0.0
        %427 = vmatpush1.msra.mxu0 0.0
        %428 = vmatprep.subr.mxu0 0.0
        %429 = vmatpush1.msra.mxu0 0.0
        %430 = vmatprep.subr.mxu0 0.0
        %431 = vmatpush1.msra.mxu0 0.0
        %432 = vmatprep.subr.mxu0 0.0
        %433 = vmatpush1.msra.mxu0 0.0
        %434 = vmatprep.subr.mxu0 0.0
        %435 = vmatpush1.msra.mxu0 0.0
        %436 = vmatprep.subr.mxu0 0.0
        %437 = vmatpush1.msra.mxu0 0.0
        %438 = vmatprep.subr.mxu0 0.0
        %439 = vmatpush1.msra.mxu0 0.0
        %440 = vmatprep.subr.mxu0 %v341
        %441 = vmatpush1.msra.mxu0 %v340
        %442 = vmatprep.subr.mxu0 %v329
        %443 = vmatpush1.msra.mxu0 %v328
        %444 = vmatprep.subr.mxu0 %v317
        %445 = vmatpush1.msra.mxu0 %v316
        %446 = vmatprep.subr.mxu0 %v305
        %447 = vmatpush1.msra.mxu0 %v304
        %448 = vmatprep.subr.mxu0 %v293
        %449 = vmatpush1.msra.mxu0 %v292
        %450 = vmatprep.subr.mxu0 %v281
        %451 = vmatpush1.msra.mxu0 %v280
        %452 = vmatprep.subr.mxu0 %v269
        %453 = vmatpush1.msra.mxu0 %v268
        %454 = vmatprep.subr.mxu0 %v257
        %455 = vmatpush1.msra.mxu0 %v256
        %456 = vmatprep.subr.mxu0 %v244
        %457 = vmatpush1.msra.mxu0 %v243
        %458 = vmatprep.subr.mxu0 0.0
        %459 = vmatpush2.msra.mxu0 0.0
        %460 = vmatprep.subr.mxu0 0.0
        %461 = vmatpush2.msra.mxu0 0.0
        %462 = vmatprep.subr.mxu0 0.0
        %463 = vmatpush2.msra.mxu0 0.0
        %464 = vmatprep.subr.mxu0 0.0
        %465 = vmatpush2.msra.mxu0 0.0
        %466 = vmatprep.subr.mxu0 0.0
        %467 = vmatpush2.msra.mxu0 0.0
        %468 = vmatprep.subr.mxu0 0.0
        %469 = vmatpush2.msra.mxu0 0.0
        %470 = vmatprep.subr.mxu0 0.0
        %471 = vmatpush2.msra.mxu0 0.0
        %472 = vmatprep.subr.mxu0 0.0
        %473 = vmatpush2.msra.mxu0 0.0
        %474 = vmatprep.subr.mxu0 0.0
        %475 = vmatpush2.msra.mxu0 0.0
        %476 = vmatprep.subr.mxu0 0.0
        %477 = vmatpush2.msra.mxu0 0.0
        %478 = vmatprep.subr.mxu0 0.0
        %479 = vmatpush2.msra.mxu0 0.0
        %480 = vmatprep.subr.mxu0 0.0
        %481 = vmatpush2.msra.mxu0 0.0
        %482 = vmatprep.subr.mxu0 0.0
        %483 = vmatpush2.msra.mxu0 0.0
        %484 = vmatprep.subr.mxu0 0.0
        %485 = vmatpush2.msra.mxu0 0.0
        %486 = vmatprep.subr.mxu0 0.0
        %487 = vmatpush2.msra.mxu0 0.0
        %488 = vmatprep.subr.mxu0 0.0
        %489 = vmatpush2.msra.mxu0 0.0
        %490 = vmatprep.mubr.f32.mxu0 0.0
        %491 = vmatmul.mubr.f32.gmra.mxu0 %v403
        %v492 = vpop.f32.mrf.mxu0
        %v493 = vadd.f32 %v364, %v492
        %v494 = vpop.f32.mrf.mxu0
        %v495 = vadd.f32 %v364, %v494
        %496 = vmatprep.mubr.f32.mxu0 0.0
        %497 = vmatmul.mubr.f32.gmra.mxu0 %v406
        %v498 = vpop.f32.mrf.mxu0
        %v499 = vadd.f32 %v369, %v498
        %v500 = vpop.f32.mrf.mxu0
        %v501 = vadd.f32 %v369, %v500
        %502 = vmatprep.mubr.f32.mxu0 0.0
        %503 = vmatmul.mubr.f32.gmra.mxu0 %v409
        %v504 = vpop.f32.mrf.mxu0
        %v505 = vadd.f32 %v374, %v504
        %v506 = vpop.f32.mrf.mxu0
        %v507 = vadd.f32 %v374, %v506
        %508 = vmatprep.mubr.f32.mxu0 0.0
        %509 = vmatmul.mubr.f32.gmra.mxu0 %v412
        %v510 = vpop.f32.mrf.mxu0
        %v511 = vadd.f32 %v379, %v510
        %v512 = vpop.f32.mrf.mxu0
        %v513 = vadd.f32 %v379, %v512
        %514 = vmatprep.mubr.f32.mxu0 0.0
        %515 = vmatmul.mubr.f32.gmra.mxu0 %v415
        %v516 = vpop.f32.mrf.mxu0
        %v517 = vadd.f32 %v384, %v516
        %v518 = vpop.f32.mrf.mxu0
        %v519 = vadd.f32 %v384, %v518
        %520 = vmatprep.mubr.f32.mxu0 0.0
        %521 = vmatmul.mubr.f32.gmra.mxu0 %v418
        %v522 = vpop.f32.mrf.mxu0
        %v523 = vadd.f32 %v389, %v522
        %v524 = vpop.f32.mrf.mxu0
        %v525 = vadd.f32 %v389, %v524
        %526 = vmatprep.mubr.f32.mxu0 0.0
        %527 = vmatmul.mubr.f32.gmra.mxu0 %v421
        %v528 = vpop.f32.mrf.mxu0
        %v529 = vadd.f32 %v394, %v528
        %v530 = vpop.f32.mrf.mxu0
        %v531 = vadd.f32 %v394, %v530
        %532 = vmatprep.mubr.f32.mxu0 0.0
        %533 = vmatmul.mubr.f32.gmra.mxu0 %v424
        %v534 = vpop.f32.mrf.mxu0
        %v535 = vadd.f32 %v399, %v534
        %v536 = vpop.f32.mrf.mxu0
        %v537 = vadd.f32 %v399, %v536
        %538 = vdwg.mxu0
        %539 = vmatprep.subr.mxu0 0.0
        %540 = vmatpush1.msra.mxu0 0.0
        %541 = vmatprep.subr.mxu0 0.0
        %542 = vmatpush1.msra.mxu0 0.0
        %543 = vmatprep.subr.mxu0 0.0
        %544 = vmatpush1.msra.mxu0 0.0
        %545 = vmatprep.subr.mxu0 0.0
        %546 = vmatpush1.msra.mxu0 0.0
        %547 = vmatprep.subr.mxu0 0.0
        %548 = vmatpush1.msra.mxu0 0.0
        %549 = vmatprep.subr.mxu0 0.0
        %550 = vmatpush1.msra.mxu0 0.0
        %551 = vmatprep.subr.mxu0 0.0
        %552 = vmatpush1.msra.mxu0 0.0
        %553 = vmatprep.subr.mxu0 0.0
        %554 = vmatpush1.msra.mxu0 %v338
        %555 = vmatprep.subr.mxu0 0.0
        %556 = vmatpush1.msra.mxu0 %v326
        %557 = vmatprep.subr.mxu0 0.0
        %558 = vmatpush1.msra.mxu0 %v314
        %559 = vmatprep.subr.mxu0 0.0
        %560 = vmatpush1.msra.mxu0 %v302
        %561 = vmatprep.subr.mxu0 0.0
        %562 = vmatpush1.msra.mxu0 %v290
        %563 = vmatprep.subr.mxu0 0.0
        %564 = vmatpush1.msra.mxu0 %v278
        %565 = vmatprep.subr.mxu0 0.0
        %566 = vmatpush1.msra.mxu0 %v266
        %567 = vmatprep.subr.mxu0 0.0
        %568 = vmatpush1.msra.mxu0 %v254
        %569 = vmatprep.subr.mxu0 0.0
        %570 = vmatpush1.msra.mxu0 %v245
        %571 = vmatprep.subr.mxu0 0.0
        %572 = vmatpush2.msra.mxu0 0.0
        %573 = vmatprep.subr.mxu0 0.0
        %574 = vmatpush2.msra.mxu0 0.0
        %575 = vmatprep.subr.mxu0 0.0
        %576 = vmatpush2.msra.mxu0 0.0
        %577 = vmatprep.subr.mxu0 0.0
        %578 = vmatpush2.msra.mxu0 0.0
        %579 = vmatprep.subr.mxu0 0.0
        %580 = vmatpush2.msra.mxu0 0.0
        %581 = vmatprep.subr.mxu0 0.0
        %582 = vmatpush2.msra.mxu0 0.0
        %583 = vmatprep.subr.mxu0 0.0
        %584 = vmatpush2.msra.mxu0 0.0
        %585 = vmatprep.subr.mxu0 0.0
        %586 = vmatpush2.msra.mxu0 0.0
        %587 = vmatprep.subr.mxu0 0.0
        %588 = vmatpush2.msra.mxu0 0.0
        %589 = vmatprep.subr.mxu0 0.0
        %590 = vmatpush2.msra.mxu0 0.0
        %591 = vmatprep.subr.mxu0 0.0
        %592 = vmatpush2.msra.mxu0 0.0
        %593 = vmatprep.subr.mxu0 0.0
        %594 = vmatpush2.msra.mxu0 0.0
        %595 = vmatprep.subr.mxu0 0.0
        %596 = vmatpush2.msra.mxu0 0.0
        %597 = vmatprep.subr.mxu0 0.0
        %598 = vmatpush2.msra.mxu0 0.0
        %599 = vmatprep.subr.mxu0 0.0
        %600 = vmatpush2.msra.mxu0 0.0
        %601 = vmatprep.subr.mxu0 0.0
        %602 = vmatpush2.msra.mxu0 0.0
        %603 = vmatprep.mubr.f32.mxu0 0.0
        %604 = vmatmul.mubr.f32.gmra.mxu0 %v403
        %v605 = vpop.f32.mrf.mxu0
        %v606 = vadd.f32 %v364, %v605
        %v607 = vpop.f32.mrf.mxu0
        %608 = vmatprep.mubr.f32.mxu0 0.0
        %609 = vmatmul.mubr.f32.gmra.mxu0 %v406
        %v610 = vpop.f32.mrf.mxu0
        %v611 = vadd.f32 %v369, %v610
        %v612 = vpop.f32.mrf.mxu0
        %613 = vmatprep.mubr.f32.mxu0 0.0
        %614 = vmatmul.mubr.f32.gmra.mxu0 %v409
        %v615 = vpop.f32.mrf.mxu0
        %v616 = vadd.f32 %v374, %v615
        %v617 = vpop.f32.mrf.mxu0
        %618 = vmatprep.mubr.f32.mxu0 0.0
        %619 = vmatmul.mubr.f32.gmra.mxu0 %v412
        %v620 = vpop.f32.mrf.mxu0
        %v621 = vadd.f32 %v379, %v620
        %v622 = vpop.f32.mrf.mxu0
        %623 = vmatprep.mubr.f32.mxu0 0.0
        %624 = vmatmul.mubr.f32.gmra.mxu0 %v415
        %v625 = vpop.f32.mrf.mxu0
        %v626 = vadd.f32 %v384, %v625
        %v627 = vpop.f32.mrf.mxu0
        %628 = vmatprep.mubr.f32.mxu0 0.0
        %629 = vmatmul.mubr.f32.gmra.mxu0 %v418
        %v630 = vpop.f32.mrf.mxu0
        %v631 = vadd.f32 %v389, %v630
        %v632 = vpop.f32.mrf.mxu0
        %633 = vmatprep.mubr.f32.mxu0 0.0
        %634 = vmatmul.mubr.f32.gmra.mxu0 %v421
        %v635 = vpop.f32.mrf.mxu0
        %v636 = vadd.f32 %v394, %v635
        %v637 = vpop.f32.mrf.mxu0
        %638 = vmatprep.mubr.f32.mxu0 0.0
        %639 = vmatmul.mubr.f32.gmra.mxu0 %v424
        %v640 = vpop.f32.mrf.mxu0
        %v641 = vadd.f32 %v399, %v640
        %v642 = vpop.f32.mrf.mxu0
        %643 = vdwg.mxu0
        %v644 = vmax.f32 %v493, 0.0
        %v645 = vmax.f32 %v495, 0.0
        %v646 = vmax.f32 %v606, 0.0
        %v647 = vmax.f32 %v499, 0.0
        %v648 = vmax.f32 %v501, 0.0
        %v649 = vmax.f32 %v611, 0.0
        %v650 = vmax.f32 %v505, 0.0
        %v651 = vmax.f32 %v507, 0.0
        %v652 = vmax.f32 %v616, 0.0
        %v653 = vmax.f32 %v511, 0.0
        %v654 = vmax.f32 %v513, 0.0
        %v655 = vmax.f32 %v621, 0.0
        %v656 = vmax.f32 %v517, 0.0
        %v657 = vmax.f32 %v519, 0.0
        %v658 = vmax.f32 %v626, 0.0
        %v659 = vmax.f32 %v523, 0.0
        %v660 = vmax.f32 %v525, 0.0
        %v661 = vmax.f32 %v631, 0.0
        %v662 = vmax.f32 %v529, 0.0
        %v663 = vmax.f32 %v531, 0.0
        %v664 = vmax.f32 %v636, 0.0
        %v665 = vmax.f32 %v535, 0.0
        %v666 = vmax.f32 %v537, 0.0
        %v667 = vmax.f32 %v641, 0.0
        %v668 = vld [vmem:[%s3] sm:$0x1]
        %v669 = vstv %s242
        %vm670 = vcmask 523264
        %v672 = vsel %vm670, %v668, 0
        %674 = vmatprep.subr.mxu0 0.0
        %675 = vmatpush1.msra.mxu0 0.0
        %676 = vmatprep.subr.mxu0 0.0
        %677 = vmatpush1.msra.mxu0 0.0
        %678 = vmatprep.subr.mxu0 0.0
        %679 = vmatpush1.msra.mxu0 0.0
        %680 = vmatprep.subr.mxu0 0.0
        %681 = vmatpush1.msra.mxu0 0.0
        %682 = vmatprep.subr.mxu0 0.0
        %683 = vmatpush1.msra.mxu0 0.0
        %684 = vmatprep.subr.mxu0 0.0
        %685 = vmatpush1.msra.mxu0 0.0
        %686 = vmatprep.subr.mxu0 0.0
        %687 = vmatpush1.msra.mxu0 0.0
        %688 = vmatprep.subr.mxu0 0.0
        %689 = vmatpush1.msra.mxu0 0.0
        %690 = vmatprep.subr.mxu0 %v666
        %691 = vmatpush1.msra.mxu0 %v665
        %692 = vmatprep.subr.mxu0 %v663
        %693 = vmatpush1.msra.mxu0 %v662
        %694 = vmatprep.subr.mxu0 %v660
        %695 = vmatpush1.msra.mxu0 %v659
        %696 = vmatprep.subr.mxu0 %v657
        %697 = vmatpush1.msra.mxu0 %v656
        %698 = vmatprep.subr.mxu0 %v654
        %699 = vmatpush1.msra.mxu0 %v653
        %700 = vmatprep.subr.mxu0 %v651
        %701 = vmatpush1.msra.mxu0 %v650
        %702 = vmatprep.subr.mxu0 %v648
        %703 = vmatpush1.msra.mxu0 %v647
        %704 = vmatprep.subr.mxu0 %v645
        %705 = vmatpush1.msra.mxu0 %v644
        %706 = vmatprep.subr.mxu0 0.0
        %707 = vmatpush2.msra.mxu0 0.0
        %708 = vmatprep.subr.mxu0 0.0
        %709 = vmatpush2.msra.mxu0 0.0
        %710 = vmatprep.subr.mxu0 0.0
        %711 = vmatpush2.msra.mxu0 0.0
        %712 = vmatprep.subr.mxu0 0.0
        %713 = vmatpush2.msra.mxu0 0.0
        %714 = vmatprep.subr.mxu0 0.0
        %715 = vmatpush2.msra.mxu0 0.0
        %716 = vmatprep.subr.mxu0 0.0
        %717 = vmatpush2.msra.mxu0 0.0
        %718 = vmatprep.subr.mxu0 0.0
        %719 = vmatpush2.msra.mxu0 0.0
        %720 = vmatprep.subr.mxu0 0.0
        %721 = vmatpush2.msra.mxu0 0.0
        %722 = vmatprep.subr.mxu0 0.0
        %723 = vmatpush2.msra.mxu0 0.0
        %724 = vmatprep.subr.mxu0 0.0
        %725 = vmatpush2.msra.mxu0 0.0
        %726 = vmatprep.subr.mxu0 0.0
        %727 = vmatpush2.msra.mxu0 0.0
        %728 = vmatprep.subr.mxu0 0.0
        %729 = vmatpush2.msra.mxu0 0.0
        %730 = vmatprep.subr.mxu0 0.0
        %731 = vmatpush2.msra.mxu0 0.0
        %732 = vmatprep.subr.mxu0 0.0
        %733 = vmatpush2.msra.mxu0 0.0
        %734 = vmatprep.subr.mxu0 0.0
        %735 = vmatpush2.msra.mxu0 0.0
        %736 = vmatprep.subr.mxu0 0.0
        %737 = vmatpush2.msra.mxu0 0.0
        %738 = vmatprep.mubr.f32.mxu0 0.0
        %739 = vmatmul.mubr.f32.gmra.mxu0 %v672
        %v740 = vpop.f32.mrf.mxu0
        %v741 = vadd.f32 %v669, %v740
        %v742 = vpop.f32.mrf.mxu0
        %v743 = vadd.f32 %v669, %v742
        %744 = vdwg.mxu0
        %745 = vmatprep.subr.mxu0 0.0
        %746 = vmatpush1.msra.mxu0 0.0
        %747 = vmatprep.subr.mxu0 0.0
        %748 = vmatpush1.msra.mxu0 0.0
        %749 = vmatprep.subr.mxu0 0.0
        %750 = vmatpush1.msra.mxu0 0.0
        %751 = vmatprep.subr.mxu0 0.0
        %752 = vmatpush1.msra.mxu0 0.0
        %753 = vmatprep.subr.mxu0 0.0
        %754 = vmatpush1.msra.mxu0 0.0
        %755 = vmatprep.subr.mxu0 0.0
        %756 = vmatpush1.msra.mxu0 0.0
        %757 = vmatprep.subr.mxu0 0.0
        %758 = vmatpush1.msra.mxu0 0.0
        %759 = vmatprep.subr.mxu0 0.0
        %760 = vmatpush1.msra.mxu0 0.0
        %761 = vmatprep.subr.mxu0 0.0
        %762 = vmatpush1.msra.mxu0 %v667
        %763 = vmatprep.subr.mxu0 0.0
        %764 = vmatpush1.msra.mxu0 %v664
        %765 = vmatprep.subr.mxu0 0.0
        %766 = vmatpush1.msra.mxu0 %v661
        %767 = vmatprep.subr.mxu0 0.0
        %768 = vmatpush1.msra.mxu0 %v658
        %769 = vmatprep.subr.mxu0 0.0
        %770 = vmatpush1.msra.mxu0 %v655
        %771 = vmatprep.subr.mxu0 0.0
        %772 = vmatpush1.msra.mxu0 %v652
        %773 = vmatprep.subr.mxu0 0.0
        %774 = vmatpush1.msra.mxu0 %v649
        %775 = vmatprep.subr.mxu0 0.0
        %776 = vmatpush1.msra.mxu0 %v646
        %777 = vmatprep.subr.mxu0 0.0
        %778 = vmatpush2.msra.mxu0 0.0
        %779 = vmatprep.subr.mxu0 0.0
        %780 = vmatpush2.msra.mxu0 0.0
        %781 = vmatprep.subr.mxu0 0.0
        %782 = vmatpush2.msra.mxu0 0.0
        %783 = vmatprep.subr.mxu0 0.0
        %784 = vmatpush2.msra.mxu0 0.0
        %785 = vmatprep.subr.mxu0 0.0
        %786 = vmatpush2.msra.mxu0 0.0
        %787 = vmatprep.subr.mxu0 0.0
        %788 = vmatpush2.msra.mxu0 0.0
        %789 = vmatprep.subr.mxu0 0.0
        %790 = vmatpush2.msra.mxu0 0.0
        %791 = vmatprep.subr.mxu0 0.0
        %792 = vmatpush2.msra.mxu0 0.0
        %793 = vmatprep.subr.mxu0 0.0
        %794 = vmatpush2.msra.mxu0 0.0
        %795 = vmatprep.subr.mxu0 0.0
        %796 = vmatpush2.msra.mxu0 0.0
        %797 = vmatprep.subr.mxu0 0.0
        %798 = vmatpush2.msra.mxu0 0.0
        %799 = vmatprep.subr.mxu0 0.0
        %800 = vmatpush2.msra.mxu0 0.0
        %801 = vmatprep.subr.mxu0 0.0
        %802 = vmatpush2.msra.mxu0 0.0
        %803 = vmatprep.subr.mxu0 0.0
        %804 = vmatpush2.msra.mxu0 0.0
        %805 = vmatprep.subr.mxu0 0.0
        %806 = vmatpush2.msra.mxu0 0.0
        %807 = vmatprep.subr.mxu0 0.0
        %808 = vmatpush2.msra.mxu0 0.0
        %809 = vmatprep.mubr.f32.mxu0 0.0
        %810 = vmatmul.mubr.f32.gmra.mxu0 %v672
        %v811 = vpop.f32.mrf.mxu0
        %v812 = vadd.f32 %v669, %v811
        %v813 = vpop.f32.mrf.mxu0
        %814 = vdwg.mxu0
        %v815 = vxor.u32 %v741, 2147483648
        %v816 = vxor.u32 %v743, 2147483648
        %v817 = vxor.u32 %v812, 2147483648
        %v818 = vmul.f32 %v815, 1.442695
        %v819 = vpow.pop %v818
        %v820 = vmul.f32 %v816, 1.442695
        %v821 = vpow.pop %v820
        %v822 = vmul.f32 %v817, 1.442695
        %v823 = vpow.pop %v822
        %v824 = vadd.f32 %v819, 1.0
        %v825 = vadd.f32 %v821, 1.0
        %v826 = vadd.f32 %v823, 1.0
        %v827 = vrcp.pop %v824
        %v828 = vmul.f32 1.0, %v827
        %v829 = vrcp.pop %v825
        %v830 = vmul.f32 1.0, %v829
        %v831 = vrcp.pop %v826
        %v832 = vmul.f32 1.0, %v831
        %v836 = vcombine.low %v828, %v830
        %v838 = vunpack.c.l.s4 1966171168
        %v839 = vunpack.c.0.s8 %v838
        %v840 = vlaneseq
        %v841 = vshrl.u32 %v840, 7
        %v842 = vsub.s32 %v839, %v841
        %v843 = vrot.slane %v836, %v842
        %v845 = vunpack.c.l.s4 1966171168
        %v846 = vunpack.c.0.s8 %v845
        %v847 = vlaneseq
        %v848 = vshrl.u32 %v847, 7
        %v849 = vsub.s32 %v846, %v848
        %v850 = vrot.slane %v832, %v849
        %v851 = vcombine.low %v843, %v850
        %v853 = vunpack.c.l.s4 1966171168
        %v854 = vunpack.c.0.s8 %v853
        %v855 = vlaneseq
        %v856 = vshrl.u32 %v855, 7
        %v857 = vsub.s32 %v854, %v856
        %v858 = vrot.slane %v851, %v857
        %v860 = vlaneseq
        %vm861 = vcmp.ge.s32.totalorder %v860, 0
        %vm862 = vcmp.lt.s32.totalorder %v860, 288
        %vm863 = vmand %vm861, %vm862
        %864 = vst.msk [vmem:[%s241] sm:$0x7] %vm863, %v858
        %s865 = sand.u32 %s141, 1
        %s866 = scalar_lea.sflag [#allocation5], %s865
        %s867 = sand.u32 %s141, 1
        %s868 = smul.addr %s867, 3
        %s869 = scalar_lea.vmem [#allocation6], %s868
        // Predicated region
        $region45: #{tpu_custom_call.1} parent=39 // pred_check
          %p870 = pneg %p151
        $region46: #{tpu_custom_call.1} parent=39 // pred_check_branch
          %872 = sbr.rel (%p870) target = $region48
        $region47: #{tpu_custom_call.1} parent=39 // pred_region
          %s874 = ssub.s32 48, 48
          %875 = vsyncadd %s866, %s874
          %s876 = smul.addr %s23, 3
          %s877 = smul.addr %s876, 16
          %s878 = scalar_lea.hbm %s5, %s877
          %s880 = sshll.u32 %s869, 4
          %s881 = int_to_ptr.vmem [resolvable:$true] %s880
          %883 = dma.vmem_to_hbm [thread:$0]  %s881, 48, %s878, %s866
        $region48: #{tpu_custom_call.1} parent=39 // pred_fallthru
          _
      $region40: #{tpu_custom_call.1} parent=5 // pred_fallthru
        _
      %p884 = scmp.le.s32.totalorder 2, %s18
      // Predicated region
      $region49: #{tpu_custom_call.1} parent=5 // pred_check
        %p885 = pneg %p884
      $region50: #{tpu_custom_call.1} parent=5 // pred_check_branch
        %887 = sbr.rel (%p885) target = $region52
      $region51: #{tpu_custom_call.1} parent=5 // pred_region
        %s888 = ssub.s32 %s18, 2
        // Predicated region
        $region53: #{tpu_custom_call.1} parent=51 // pred_check
          %p889 = pneg %p157
        $region54: #{tpu_custom_call.1} parent=51 // pred_check_branch
          %891 = sbr.rel (%p889) target = $region56
        $region55: #{tpu_custom_call.1} parent=51 // pred_region
          %s892 = sand.u32 %s142, 1
          %s893 = scalar_lea.sflag [#allocation5], %s892
          %s894 = sand.u32 %s142, 1
          %s895 = smul.addr %s894, 3
          %s896 = scalar_lea.vmem [#allocation6], %s895
          %897 = dma.done %s893, 48
        $region56: #{tpu_custom_call.1} parent=51 // pred_fallthru
          _
      $region52: #{tpu_custom_call.1} parent=5 // pred_fallthru
        _
    $region6: #{tpu_custom_call.1} parent=1 // loop_footer
      %s22 = sadd.s32 1, %s18
    $region7: #{tpu_custom_call.1} parent=1 // loop_footer_branch
      %17 = sbr.rel target = $region3
    $region8: #{tpu_custom_call.1} parent=1 // loop_exit
      _
    %898 = vsyncpa [#allocation4], 1
    %s899 = scalar_lea.sflag [#allocation4], 1
    %900 = vsyncpa %s899, 1
    %901 = vsyncpa [#allocation5], 1
    %s902 = scalar_lea.sflag [#allocation5], 1
    %903 = vsyncpa %s902, 1

</llo_original>
